<compile_context>
chip_gen: v7x
topology: tpu7x:2x2x1
jax: 0.10.0
libtpu: 0.0.40
codegen_flags: <defaults>
</compile_context>

<pallas_src>
import functools

import jax
import jax.numpy as jnp
import numpy as np
from jax.experimental import pallas as pl
from jax.experimental.pallas import tpu as pltpu


def _round_up(v, m):
    return ((v + m - 1) // m) * m


def fgn_kernel(x_ref, p_ref, bias_ref, csq_ref, invsc2_ref, wpi_ref,
               res_ref, nl_ref, *, tn):
    x = x_ref[...]                        # (tb, K) f32
    p = p_ref[...]                        # (K, 2*tn) = [w_tile_j | c_tile_j]

    # One fused MXU pass in canonical (m,k)x(k,n) layout:
    #   xp[:, :tn] = x @ w_tile.T    xp[:, tn:] = x @ c_tile.T
    # (precision=jax.lax.Precision.HIGHEST could be added here for bit-closer
    #  parity with the f32 PyTorch reference; default passes 2e-3 tolerance.)
    xp = jnp.dot(x, p, preferred_element_type=jnp.float32)    # (tb, 2*tn)
    xw = xp[:, :tn]                       # slice at a 128-lane boundary (view)
    xc = xp[:, tn:]

    # Pairwise squared distance via |x|^2 + |c|^2 - 2 x.c (clamped >= 0).
    x_sq = jnp.sum(x * x, axis=-1, keepdims=True)             # (tb, 1)
    d2 = jnp.maximum(x_sq + csq_ref[...] - 2.0 * xc, 0.0)     # (tb, tn)

    # Per-tile NL partial: sublane reduce only; scale by softmax(pi)/sig^2 once
    # on the reduced (1, tn) row. Lane reduce / mean deferred to the wrapper.
    # Padded batch rows (x == 0) contribute exactly |c|^2 per row; corrected
    # analytically outside the kernel (no per-step row mask needed).
    nl_ref[...] = (jnp.sum(d2, axis=0, keepdims=True)
                   * wpi_ref[...]).reshape(nl_ref.shape)

    # Gaussian envelope and output (reciprocal-multiply, no divide).
    g = jnp.exp(-d2 * invsc2_ref[...])
    res_ref[...] = ((xw + bias_ref[...]) * g).astype(res_ref.dtype)


def fgn_forward(x, weights, centers, sigs, pis, *, tb=None):
    """Forward of FGN_layer.

    x: (B, K) f32; weights, centers: (N, K); sigs, pis: (N,).
    Returns (res (B, N) f32, neg_likelihood scalar f32).
    """
    B, K = x.shape
    N = weights.shape[0]
    eps = 0.001

    # ---- N padding / tiling (lane-dense output; tn multiple of 128) ----
    n_pad = _round_up(N, 128)
    tn = n_pad
    for cand in (512, 384, 256, 128):
        if n_pad >= cand and n_pad % cand == 0:
            tn = cand
            break
    num_nt = n_pad // tn

    # ---- parameter-only precompute (hoisted off the per-step critical path) ----
    pi_norm = jax.nn.softmax(pis, axis=-1)                     # (N,)
    biases = -jnp.sum(weights * centers, axis=-1)              # (N,)
    c_sq = jnp.sum(centers * centers, axis=-1)                 # (N,)
    inv_sc2 = 1.0 / jnp.square(jnp.maximum(sigs, eps))         # clamped (envelope)
    wpi = pi_norm / jnp.square(sigs)                           # unclamped (matches ref NL)
    nl_const = jnp.sum(2.0 * K * jnp.log(sigs) * pi_norm)      # scalar

    def pad_row(v):
        return jnp.pad(v, (0, n_pad - N)).reshape(1, n_pad).astype(jnp.float32)

    bias_p = pad_row(biases)
    csq_p = pad_row(c_sq)
    invsc2_p = pad_row(inv_sc2)
    wpi_p = pad_row(wpi)

    # Stacked parameter in canonical (K, 2*n_pad) layout; columns grouped per
    # N-tile as [w_tile_0 | c_tile_0 | w_tile_1 | c_tile_1 | ...] so each grid
    # step contracts against one contiguous (K, 2*tn) block.
    w_t = jnp.pad(weights, ((0, n_pad - N), (0, 0))).T.astype(jnp.float32)
    c_t = jnp.pad(centers, ((0, n_pad - N), (0, 0))).T.astype(jnp.float32)
    wc = jnp.concatenate(
        [w_t.reshape(K, num_nt, 1, tn), c_t.reshape(K, num_nt, 1, tn)],
        axis=2).reshape(K, 2 * n_pad)

    # ---- batch tiling (8-aligned sublanes; large tiles, VMEM-aware) ----
    if tb is None:
        tb = min(_round_up(B, 8), 2048)
        # keep double-buffered x + res tiles comfortably inside scoped VMEM
        while tb > 64 and 8 * tb * (K + tn) > 12 * (1 << 20):
            tb //= 2
    tb = max(8, _round_up(tb, 8))
    b_pad = _round_up(B, tb)
    x_p = jnp.pad(x, ((0, b_pad - B), (0, 0))).astype(jnp.float32)
    num_bt = b_pad // tb

    kernel = functools.partial(fgn_kernel, tn=tn)

    cost = pl.CostEstimate(
        flops=2 * b_pad * K * (2 * n_pad) + 8 * b_pad * n_pad,
        transcendentals=b_pad * n_pad,
        bytes_accessed=4 * (x_p.size + wc.size + 4 * n_pad
                            + b_pad * n_pad + num_bt * n_pad),
    )
    # Scoped-VMEM limit: above the per-generation defaults, safely below v7x's
    # 64 MiB physical VMEM.
    vmem_limit = int(min(48 * (1 << 20),
                         max(32 * (1 << 20),
                             4 * (2 * tb * (K + tn) + 2 * K * tn + 8 * tn))))

    res_p, nl_parts = pl.pallas_call(
        kernel,
        out_shape=(
            jax.ShapeDtypeStruct((b_pad, n_pad), jnp.float32),
            jax.ShapeDtypeStruct((num_bt, 1, n_pad), jnp.float32),
        ),
        grid=(num_bt, num_nt),
        in_specs=[
            pl.BlockSpec((tb, K), lambda i, j: (i, 0)),        # x tile (pipelined)
            pl.BlockSpec((K, 2 * tn), lambda i, j: (0, j)),    # stacked [w | c] tile
            pl.BlockSpec((1, tn), lambda i, j: (0, j)),        # biases
            pl.BlockSpec((1, tn), lambda i, j: (0, j)),        # |c|^2
            pl.BlockSpec((1, tn), lambda i, j: (0, j)),        # 1/clamp(sig)^2
            pl.BlockSpec((1, tn), lambda i, j: (0, j)),        # softmax(pi)/sig^2
        ],
        out_specs=(
            pl.BlockSpec((tb, tn), lambda i, j: (i, j)),       # res (lane-dense)
            pl.BlockSpec((1, 1, tn), lambda i, j: (i, 0, j)),  # NL per-tile partials
        ),
        compiler_params=pltpu.CompilerParams(
            dimension_semantics=("parallel", "parallel"),      # megacore-shardable
            vmem_limit_bytes=vmem_limit),
        cost_estimate=cost,
    )(x_p, wc, bias_p, csq_p, invsc2_p, wpi_p)

    res = res_p[:B, :N]
    # Analytic correction for all-zero padded batch rows (d2 == |c|^2 exactly).
    pad_row_corr = (b_pad - B) * jnp.sum(c_sq * wpi)
    neg_likelihood = (jnp.sum(nl_parts) - pad_row_corr + B * nl_const) / (B * N)
    return res, neg_likelihood


def fgn_reference(x, weights, centers, sigs, pis):
    """Pure-JAX reference mirroring the PyTorch forward exactly."""
    in_features = x.shape[-1]
    biases = -jnp.sum(weights * centers, axis=-1)
    l = x @ weights.T + biases
    g = (x[:, None, :] - centers[None, :, :]) ** 2
    g = g.sum(axis=2)
    eps = 0.001
    gg = jnp.exp(-g / jnp.maximum(sigs, eps) ** 2)
    res = l * gg
    nl = g / sigs ** 2 + 2 * in_features * jnp.log(sigs)
    nl = nl * jax.nn.softmax(pis, axis=-1)
    return res, jnp.mean(nl)


if __name__ == "__main__":
    in_features, out_features = 32, 64

    key = jax.random.PRNGKey(0)
    k_x, k_w, k_c, k_x2 = jax.random.split(key, 4)

    # Deterministic parameter init mirroring FGN_layer.reset_parameters():
    s = np.sqrt(in_features)
    weights = jax.random.uniform(
        k_w, (out_features, in_features), minval=-s, maxval=s, dtype=jnp.float32)
    centers = jax.random.normal(k_c, (out_features, in_features), dtype=jnp.float32)
    sigs = jnp.full((out_features,), np.log2(in_features), dtype=jnp.float32)
    pis = jnp.full((out_features,), 1.0 / out_features, dtype=jnp.float32)

    # Case 1: single-tile batch.
    B1 = 8
    x1 = jax.random.normal(k_x, (B1, in_features), dtype=jnp.float32)
    res1, nl1 = jax.block_until_ready(fgn_forward(x1, weights, centers, sigs, pis))
    res1_ref, nl1_ref = fgn_reference(x1, weights, centers, sigs, pis)
    np.testing.assert_allclose(np.asarray(res1), np.asarray(res1_ref), rtol=2e-3, atol=2e-3)
    np.testing.assert_allclose(float(nl1), float(nl1_ref), rtol=2e-3, atol=2e-3)

    # Case 2: multi-tile batch with padded rows (exercises per-tile NL partials,
    # the parallel batch axis, and the analytic padded-row correction).
    B2 = 20
    x2 = jax.random.normal(k_x2, (B2, in_features), dtype=jnp.float32)
    res2, nl2 = jax.block_until_ready(
        fgn_forward(x2, weights, centers, sigs, pis, tb=8))
    res2_ref, nl2_ref = fgn_reference(x2, weights, centers, sigs, pis)
    np.testing.assert_allclose(np.asarray(res2), np.asarray(res2_ref), rtol=2e-3, atol=2e-3)
    np.testing.assert_allclose(float(nl2), float(nl2_ref), rtol=2e-3, atol=2e-3)

    print("KERNEL_OK")
</pallas_src>

<mosaic_0001>
module attributes {stable_mosaic.version = 11 : i64} {
  func.func @fgn_kernel(%arg0: i32, %arg1: i32, %arg2: memref<8x32xf32, #tpu.memory_space<vmem>>, %arg3: memref<32x256xf32, #tpu.memory_space<vmem>>, %arg4: memref<1x128xf32, #tpu.memory_space<vmem>>, %arg5: memref<1x128xf32, #tpu.memory_space<vmem>>, %arg6: memref<1x128xf32, #tpu.memory_space<vmem>>, %arg7: memref<1x128xf32, #tpu.memory_space<vmem>>, %arg8: memref<8x128xf32, #tpu.memory_space<vmem>>, %arg9: memref<1x1x128xf32, #tpu.memory_space<vmem>>) attributes {dimension_semantics = [#tpu.dimension_semantics<parallel>, #tpu.dimension_semantics<parallel>], iteration_bounds = array<i64: 1, 1>, scalar_prefetch = 0 : i64, scratch_operands = 0 : i64, tpu.core_type = #tpu.core_type<tc>, window_params = [{transform_indices = @transform_0, window_bounds = array<i64: 8, 32>}, {transform_indices = @transform_1, window_bounds = array<i64: 32, 256>}, {transform_indices = @transform_2, window_bounds = array<i64: 1, 128>}, {transform_indices = @transform_3, window_bounds = array<i64: 1, 128>}, {transform_indices = @transform_4, window_bounds = array<i64: 1, 128>}, {transform_indices = @transform_5, window_bounds = array<i64: 1, 128>}, {transform_indices = @transform_6, window_bounds = array<i64: 8, 128>}, {transform_indices = @transform_7, window_bounds = array<i64: 1, 1, 128>}]} {
    %c0 = arith.constant 0 : index
    %c0_0 = arith.constant 0 : index
    %0 = vector.load %arg2[%c0, %c0_0] : memref<8x32xf32, #tpu.memory_space<vmem>>, vector<8x32xf32>
    %c0_1 = arith.constant 0 : index
    %c0_2 = arith.constant 0 : index
    %1 = vector.load %arg3[%c0_1, %c0_2] : memref<32x256xf32, #tpu.memory_space<vmem>>, vector<32x256xf32>
    %cst = arith.constant dense<0.000000e+00> : vector<8x256xf32>
    %2 = tpu.matmul %0, %1, %cst {dimension_numbers = #tpu.dot_dimension_numbers<[1], [0], [0], [1], [0, 0, 1, 1], [], []>} : vector<8x32xf32>, vector<32x256xf32>, vector<8x256xf32> -> vector<8x256xf32>
    %3 = vector.extract_strided_slice %2 {offsets = [0, 0], sizes = [8, 128], strides = [1, 1]} : vector<8x256xf32> to vector<8x128xf32>
    %4 = vector.extract_strided_slice %2 {offsets = [0, 128], sizes = [8, 128], strides = [1, 1]} : vector<8x256xf32> to vector<8x128xf32>
    %5 = arith.mulf %0, %0 : vector<8x32xf32>
    %cst_3 = arith.constant dense<0.000000e+00> : vector<8xf32>
    %6 = vector.multi_reduction <add>, %5, %cst_3 [1] : vector<8x32xf32> to vector<8xf32>
    %7 = vector.shape_cast %6 : vector<8xf32> to vector<8x1xf32>
    %c0_4 = arith.constant 0 : index
    %c0_5 = arith.constant 0 : index
    %8 = vector.load %arg5[%c0_4, %c0_5] : memref<1x128xf32, #tpu.memory_space<vmem>>, vector<1x128xf32>
    %9 = vector.broadcast %7 : vector<8x1xf32> to vector<8x128xf32>
    %10 = vector.broadcast %8 : vector<1x128xf32> to vector<8x128xf32>
    %11 = arith.addf %9, %10 : vector<8x128xf32>
    %cst_6 = arith.constant 2.000000e+00 : f32
    %12 = vector.broadcast %cst_6 : f32 to vector<8x128xf32>
    %13 = arith.mulf %12, %4 : vector<8x128xf32>
    %14 = arith.subf %11, %13 : vector<8x128xf32>
    %cst_7 = arith.constant 0.000000e+00 : f32
    %15 = vector.broadcast %cst_7 : f32 to vector<8x128xf32>
    %16 = arith.maximumf %14, %15 : vector<8x128xf32>
    %cst_8 = arith.constant dense<0.000000e+00> : vector<128xf32>
    %17 = vector.multi_reduction <add>, %16, %cst_8 [0] : vector<8x128xf32> to vector<128xf32>
    %18 = vector.shape_cast %17 : vector<128xf32> to vector<1x128xf32>
    %c0_9 = arith.constant 0 : index
    %c0_10 = arith.constant 0 : index
    %19 = vector.load %arg7[%c0_9, %c0_10] : memref<1x128xf32, #tpu.memory_space<vmem>>, vector<1x128xf32>
    %20 = arith.mulf %18, %19 : vector<1x128xf32>
    %21 = vector.shape_cast %20 : vector<1x128xf32> to vector<1x1x128xf32>
    %c0_11 = arith.constant 0 : index
    %c0_12 = arith.constant 0 : index
    %c0_13 = arith.constant 0 : index
    %22 = vector.load %arg9[%c0_11, %c0_12, %c0_13] : memref<1x1x128xf32, #tpu.memory_space<vmem>>, vector<1x1x128xf32>
    tpu.vector_store %arg9[%c0_11, %c0_12, %c0_13], %21 {strides = array<i32>} : memref<1x1x128xf32, #tpu.memory_space<vmem>>, vector<1x1x128xf32>,
    %cst_14 = arith.constant 0.000000e+00 : f32
    %23 = vector.broadcast %cst_14 : f32 to vector<8x128xf32>
    %24 = arith.subf %23, %16 : vector<8x128xf32>
    %c0_15 = arith.constant 0 : index
    %c0_16 = arith.constant 0 : index
    %25 = vector.load %arg6[%c0_15, %c0_16] : memref<1x128xf32, #tpu.memory_space<vmem>>, vector<1x128xf32>
    %26 = vector.broadcast %25 : vector<1x128xf32> to vector<8x128xf32>
    %27 = arith.mulf %24, %26 : vector<8x128xf32>
    %28 = math.exp %27 : vector<8x128xf32>
    %c0_17 = arith.constant 0 : index
    %c0_18 = arith.constant 0 : index
    %29 = vector.load %arg4[%c0_17, %c0_18] : memref<1x128xf32, #tpu.memory_space<vmem>>, vector<1x128xf32>
    %30 = vector.broadcast %29 : vector<1x128xf32> to vector<8x128xf32>
    %31 = arith.addf %3, %30 : vector<8x128xf32>
    %32 = arith.mulf %31, %28 : vector<8x128xf32>
    %c0_19 = arith.constant 0 : index
    %c0_20 = arith.constant 0 : index
    %33 = vector.load %arg8[%c0_19, %c0_20] : memref<8x128xf32, #tpu.memory_space<vmem>>, vector<8x128xf32>
    tpu.vector_store %arg8[%c0_19, %c0_20], %32 {strides = array<i32>} : memref<8x128xf32, #tpu.memory_space<vmem>>, vector<8x128xf32>,
    return
  }
  func.func @transform_0(%arg0: i32, %arg1: i32) -> (i32, i32) {
    %c0_i32 = arith.constant 0 : i32
    %c0_i32_0 = arith.constant 0 : i32
    return %arg0, %c0_i32 : i32, i32
  }
  func.func @transform_1(%arg0: i32, %arg1: i32) -> (i32, i32) {
    %c0_i32 = arith.constant 0 : i32
    %c0_i32_0 = arith.constant 0 : i32
    return %c0_i32, %arg1 : i32, i32
  }
  func.func @transform_2(%arg0: i32, %arg1: i32) -> (i32, i32) {
    %c0_i32 = arith.constant 0 : i32
    %c0_i32_0 = arith.constant 0 : i32
    return %c0_i32, %arg1 : i32, i32
  }
  func.func @transform_3(%arg0: i32, %arg1: i32) -> (i32, i32) {
    %c0_i32 = arith.constant 0 : i32
    %c0_i32_0 = arith.constant 0 : i32
    return %c0_i32, %arg1 : i32, i32
  }
  func.func @transform_4(%arg0: i32, %arg1: i32) -> (i32, i32) {
    %c0_i32 = arith.constant 0 : i32
    %c0_i32_0 = arith.constant 0 : i32
    return %c0_i32, %arg1 : i32, i32
  }
  func.func @transform_5(%arg0: i32, %arg1: i32) -> (i32, i32) {
    %c0_i32 = arith.constant 0 : i32
    %c0_i32_0 = arith.constant 0 : i32
    return %c0_i32, %arg1 : i32, i32
  }
  func.func @transform_6(%arg0: i32, %arg1: i32) -> (i32, i32) {
    %c0_i32 = arith.constant 0 : i32
    return %arg0, %arg1 : i32, i32
  }
  func.func @transform_7(%arg0: i32, %arg1: i32) -> (i32, i32, i32) {
    %c0_i32 = arith.constant 0 : i32
    %c0_i32_0 = arith.constant 0 : i32
    return %arg0, %c0_i32, %arg1 : i32, i32, i32
  }
}

</mosaic_0001>

<llo_original>
// kernel: tpu_custom_call.1
$region0: #{tpu_custom_call.1}
  #allocation0 [shape = 'u32[]', space=smem, size = 0x4, offset = 0x4, fixed_abs, tag = 'smem constant byte address 0x4 - core index']
  #allocation1 [shape = 'u32[144,128]{1,0:T(1,128)}', space=vmem, size = 0x12000, scoped, tag = 'internal scratch']
  %s0 = inlined_call_operand.hbm [shape: f32[8,32], index: 0, kind: input, shape index: {}]
  %s1 = inlined_call_operand.hbm [shape: f32[32,256], index: 1, kind: input, shape index: {}]
  %s2 = inlined_call_operand.vmem [shape: f32[1,128], index: 2, kind: input, shape index: {}]
  %s3 = inlined_call_operand.vmem [shape: f32[1,128], index: 3, kind: input, shape index: {}]
  %s4 = inlined_call_operand.vmem [shape: f32[1,128], index: 4, kind: input, shape index: {}]
  %s5 = inlined_call_operand.vmem [shape: f32[1,128], index: 5, kind: input, shape index: {}]
  %s6 = inlined_call_operand.hbm [shape: f32[8,128], index: 6, kind: output, shape index: {0}]
  %s7 = inlined_call_operand.hbm [shape: f32[1,1,128], index: 7, kind: output, shape index: {1}]
  %8 = xla_tuple %s6, %s7
  %s9 = sld [smem:[#allocation0]]
  $region50: #{tpu_custom_call.1} parent=0
    _
  %s11 = ssub.s32 1, %s9
  %s12 = scalar_select 0, %s11, %s9
  $region1: #{tpu_custom_call.1} parent=0
    #allocation2 [shape = 'u8[4096]{0}', space=vmem, size = 0x1000, scoped, tag = 'input window, operand 0, single buffered']
    #allocation3 [shape = 's32[1]{0}', space=sflag, size = 0x4, scoped, tag = 'scoped memory for tpu_custom_call.1']
    #allocation4 [shape = 's32[1]{0}', space=sflag, size = 0x4, scoped, tag = 'scoped memory for tpu_custom_call.1']
    #allocation5 [shape = 'u8[32768]{0}', space=vmem, size = 0x8000, scoped, tag = 'input window, operand 1, single buffered']
    #allocation6 [shape = 's32[1]{0}', space=sflag, size = 0x4, scoped, tag = 'scoped memory for tpu_custom_call.1']
    #allocation7 [shape = 'u8[4096]{0}', space=vmem, size = 0x1000, scoped, tag = 'output window, operand 0, single buffered']
    #allocation8 [shape = 'u8[512]{0}', space=vmem, size = 0x400, scoped, tag = 'output window, operand 1, single buffered']
    #allocation9 [shape = 's32[1]{0}', space=sflag, size = 0x4, scoped, tag = 'scoped memory for tpu_custom_call.1']
    %13 = vsyncpa [#allocation3], 0
    %14 = vsyncpa [#allocation6], 0
    %15 = vsyncpa [#allocation4], 0
    %16 = vsyncpa [#allocation9], 0
    // Predicated region
    $region2: #{tpu_custom_call.1} parent=1 // pred_check
      _
    $region3: #{tpu_custom_call.1} parent=1 // pred_check_branch
      %18 = sbr.rel (0) target = $region5
    $region4: #{tpu_custom_call.1} parent=1 // pred_region
      %s20 = ssub.s32 128, 128
      %21 = vsyncadd [#allocation3], %s20
      %s23 = sshll.u32 [#allocation2], 4
      %s24 = int_to_ptr.vmem [resolvable:$true] %s23
      %26 = dma.hbm_to_vmem [thread:$0]  %s0, 128, %s24, [#allocation3]
    $region5: #{tpu_custom_call.1} parent=1 // pred_fallthru
      _
    // Predicated region
    $region6: #{tpu_custom_call.1} parent=1 // pred_check
      _
    $region7: #{tpu_custom_call.1} parent=1 // pred_check_branch
      %28 = sbr.rel (0) target = $region9
    $region8: #{tpu_custom_call.1} parent=1 // pred_region
      %s30 = ssub.s32 1024, 1024
      %31 = vsyncadd [#allocation6], %s30
      %s32 = sshll.u32 [#allocation5], 4
      %s33 = int_to_ptr.vmem [resolvable:$true] %s32
      %38 = dma.hbm_to_vmem [thread:$0]  %s1, 1024, %s33, [#allocation6], 256, 256, 16
    $region9: #{tpu_custom_call.1} parent=1 // pred_fallthru
      _
    // Predicated region
    $region10: #{tpu_custom_call.1} parent=1 // pred_check
      _
    $region11: #{tpu_custom_call.1} parent=1 // pred_check_branch
      %40 = sbr.rel (0) target = $region13
    $region12: #{tpu_custom_call.1} parent=1 // pred_region
      _
    $region13: #{tpu_custom_call.1} parent=1 // pred_fallthru
      _
    // Predicated region
    $region14: #{tpu_custom_call.1} parent=1 // pred_check
      _
    $region15: #{tpu_custom_call.1} parent=1 // pred_check_branch
      %42 = sbr.rel (0) target = $region17
    $region16: #{tpu_custom_call.1} parent=1 // pred_region
      _
    $region17: #{tpu_custom_call.1} parent=1 // pred_fallthru
      _
    // Predicated region
    $region18: #{tpu_custom_call.1} parent=1 // pred_check
      _
    $region19: #{tpu_custom_call.1} parent=1 // pred_check_branch
      %44 = sbr.rel (0) target = $region21
    $region20: #{tpu_custom_call.1} parent=1 // pred_region
      _
    $region21: #{tpu_custom_call.1} parent=1 // pred_fallthru
      _
    // Predicated region
    $region22: #{tpu_custom_call.1} parent=1 // pred_check
      _
    $region23: #{tpu_custom_call.1} parent=1 // pred_check_branch
      %46 = sbr.rel (0) target = $region25
    $region24: #{tpu_custom_call.1} parent=1 // pred_region
      _
    $region25: #{tpu_custom_call.1} parent=1 // pred_fallthru
      _
    // Predicated region
    $region26: #{tpu_custom_call.1} parent=1 // pred_check
      _
    $region27: #{tpu_custom_call.1} parent=1 // pred_check_branch
      %48 = sbr.rel (0) target = $region29
    $region28: #{tpu_custom_call.1} parent=1 // pred_region
      %49 = dma.done [#allocation3], 128
    $region29: #{tpu_custom_call.1} parent=1 // pred_fallthru
      _
    // Predicated region
    $region30: #{tpu_custom_call.1} parent=1 // pred_check
      _
    $region31: #{tpu_custom_call.1} parent=1 // pred_check_branch
      %51 = sbr.rel (0) target = $region33
    $region32: #{tpu_custom_call.1} parent=1 // pred_region
      %52 = dma.done [#allocation6], 1024
    $region33: #{tpu_custom_call.1} parent=1 // pred_fallthru
      _
    %v53 = vld [vmem:[#allocation2] sm:$0xff]
    %v54 = vld [vmem:[#allocation5] sm:$0xff]
    %v55 = vld [vmem:[#allocation5 + $0x8] sm:$0xff]
    %v56 = vld [vmem:[#allocation5 + $0x10] sm:$0xff]
    %v57 = vld [vmem:[#allocation5 + $0x18] sm:$0xff]
    %v58 = vld [vmem:[#allocation5 + $0x20] sm:$0xff]
    %v59 = vld [vmem:[#allocation5 + $0x28] sm:$0xff]
    %v60 = vld [vmem:[#allocation5 + $0x30] sm:$0xff]
    %v61 = vld [vmem:[#allocation5 + $0x38] sm:$0xff]
    %vm62 = vcmask 261120
    %v64 = vsel %vm62, %v53, 0
    %66 = vmatprep.subr.mxu0 %v55
    %67 = vmatpush1.msra.mxu0 %v54
    %68 = vmatprep.subr.mxu0 %v57
    %69 = vmatpush1.msra.mxu0 %v56
    %70 = vmatprep.subr.mxu0 %v59
    %71 = vmatpush1.msra.mxu0 %v58
    %72 = vmatprep.subr.mxu0 %v61
    %73 = vmatpush1.msra.mxu0 %v60
    %74 = vmatprep.subr.mxu0 0.0
    %75 = vmatpush1.msra.mxu0 0.0
    %76 = vmatprep.subr.mxu0 0.0
    %77 = vmatpush1.msra.mxu0 0.0
    %78 = vmatprep.subr.mxu0 0.0
    %79 = vmatpush1.msra.mxu0 0.0
    %80 = vmatprep.subr.mxu0 0.0
    %81 = vmatpush1.msra.mxu0 0.0
    %82 = vmatprep.subr.mxu0 0.0
    %83 = vmatpush1.msra.mxu0 0.0
    %84 = vmatprep.subr.mxu0 0.0
    %85 = vmatpush1.msra.mxu0 0.0
    %86 = vmatprep.subr.mxu0 0.0
    %87 = vmatpush1.msra.mxu0 0.0
    %88 = vmatprep.subr.mxu0 0.0
    %89 = vmatpush1.msra.mxu0 0.0
    %90 = vmatprep.subr.mxu0 0.0
    %91 = vmatpush1.msra.mxu0 0.0
    %92 = vmatprep.subr.mxu0 0.0
    %93 = vmatpush1.msra.mxu0 0.0
    %94 = vmatprep.subr.mxu0 0.0
    %95 = vmatpush1.msra.mxu0 0.0
    %96 = vmatprep.subr.mxu0 0.0
    %97 = vmatpush1.msra.mxu0 0.0
    %98 = vmatprep.subr.mxu0 0.0
    %99 = vmatpush1.msra.mxu0 0.0
    %100 = vmatprep.subr.mxu0 0.0
    %101 = vmatpush1.msra.mxu0 0.0
    %102 = vmatprep.subr.mxu0 0.0
    %103 = vmatpush1.msra.mxu0 0.0
    %104 = vmatprep.subr.mxu0 0.0
    %105 = vmatpush1.msra.mxu0 0.0
    %106 = vmatprep.subr.mxu0 0.0
    %107 = vmatpush1.msra.mxu0 0.0
    %108 = vmatprep.subr.mxu0 0.0
    %109 = vmatpush1.msra.mxu0 0.0
    %110 = vmatprep.subr.mxu0 0.0
    %111 = vmatpush1.msra.mxu0 0.0
    %112 = vmatprep.subr.mxu0 0.0
    %113 = vmatpush1.msra.mxu0 0.0
    %114 = vmatprep.subr.mxu0 0.0
    %115 = vmatpush1.msra.mxu0 0.0
    %116 = vmatprep.subr.mxu0 0.0
    %117 = vmatpush1.msra.mxu0 0.0
    %118 = vmatprep.subr.mxu0 0.0
    %119 = vmatpush1.msra.mxu0 0.0
    %120 = vmatprep.subr.mxu0 0.0
    %121 = vmatpush1.msra.mxu0 0.0
    %122 = vmatprep.subr.mxu0 0.0
    %123 = vmatpush1.msra.mxu0 0.0
    %124 = vmatprep.subr.mxu0 0.0
    %125 = vmatpush1.msra.mxu0 0.0
    %126 = vmatprep.subr.mxu0 0.0
    %127 = vmatpush1.msra.mxu0 0.0
    %128 = vmatprep.subr.mxu0 0.0
    %129 = vmatpush1.msra.mxu0 0.0
    %130 = vmatprep.mubr.f32.mxu0 0.0
    %131 = vmatmul.mubr.f32.gmra.mrb[0].mxu0 %v64
    %v132 = vpop.f32.mrb[0].mxu0
    %v133 = vadd.f32 0.0, %v132
    %v134 = vpop.f32.mrb[0].mxu0
    %v135 = vadd.f32 0.0, %v134
    %136 = vdwg.mxu0
    %v137 = vmul.f32 %v53, %v53
    %v138 = vsel %vm62, %v137, 0.0
    %139 = vadd.xlane.f32.xlu0 %v138
    %v140 = vpop.xlane.xlu0 %139
    %v141 = vld [vmem:[%s3] sm:$0x1]
    %v143 = vlaneseq
    %v144 = vshrl.u32 %v143, 7
    %v145 = vsub.s32 0, %v144
    %v146 = vrot.slane %v141, %v145
    %v148 = vadd.f32 %v140, %v146
    %v149 = vmul.f32 %v135, 2.0
    %v150 = vsub.f32 %v148, %v149
    %v151 = vmax.f32 %v150, 0.0
    %v152 = vrot.slane %v151, 4
    %v153 = vadd.f32 %v151, %v152
    %v154 = vrot.slane %v153, 2
    %v155 = vadd.f32 %v153, %v154
    %v156 = vrot.slane %v155, 1
    %v157 = vadd.f32 %v155, %v156
    %v158 = vld [vmem:[%s5] sm:$0x1]
    %v159 = vmul.f32 %v157, %v158
    %160 = vst [vmem:[#allocation8] sm:$0x1] %v159
    %v161 = vsub.f32 0.0, %v151
    %v162 = vld [vmem:[%s4] sm:$0x1]
    %v164 = vlaneseq
    %v165 = vshrl.u32 %v164, 7
    %v166 = vsub.s32 0, %v165
    %v167 = vrot.slane %v162, %v166
    %v169 = vmul.f32 %v161, %v167
    %v170 = vmul.f32 %v169, 1.442695
    %v171 = vpow.pop %v170
    %v172 = vld [vmem:[%s2] sm:$0x1]
    %v174 = vlaneseq
    %v175 = vshrl.u32 %v174, 7
    %v176 = vsub.s32 0, %v175
    %v177 = vrot.slane %v172, %v176
    %v179 = vadd.f32 %v133, %v177
    %v180 = vmul.f32 %v179, %v171
    %181 = vst [vmem:[#allocation7] sm:$0xff] %v180
    // Predicated region
    $region34: #{tpu_custom_call.1} parent=1 // pred_check
      _
    $region35: #{tpu_custom_call.1} parent=1 // pred_check_branch
      %183 = sbr.rel (0) target = $region37
    $region36: #{tpu_custom_call.1} parent=1 // pred_region
      %s185 = ssub.s32 128, 128
      %186 = vsyncadd [#allocation4], %s185
      %s188 = sshll.u32 [#allocation7], 4
      %s189 = int_to_ptr.vmem [resolvable:$true] %s188
      %191 = dma.vmem_to_hbm [thread:$0]  %s189, 128, %s6, [#allocation4]
    $region37: #{tpu_custom_call.1} parent=1 // pred_fallthru
      _
    // Predicated region
    $region38: #{tpu_custom_call.1} parent=1 // pred_check
      _
    $region39: #{tpu_custom_call.1} parent=1 // pred_check_branch
      %193 = sbr.rel (0) target = $region41
    $region40: #{tpu_custom_call.1} parent=1 // pred_region
      %s195 = ssub.s32 16, 16
      %196 = vsyncadd [#allocation9], %s195
      %s198 = sshll.u32 [#allocation8], 4
      %s199 = int_to_ptr.vmem [resolvable:$true] %s198
      %201 = dma.vmem_to_hbm [thread:$0]  %s199, 16, %s7, [#allocation9]
    $region41: #{tpu_custom_call.1} parent=1 // pred_fallthru
      _
    // Predicated region
    $region42: #{tpu_custom_call.1} parent=1 // pred_check
      _
    $region43: #{tpu_custom_call.1} parent=1 // pred_check_branch
      %203 = sbr.rel (0) target = $region45
    $region44: #{tpu_custom_call.1} parent=1 // pred_region
      %204 = dma.done [#allocation4], 128
    $region45: #{tpu_custom_call.1} parent=1 // pred_fallthru
      _
    // Predicated region
    $region46: #{tpu_custom_call.1} parent=1 // pred_check
      _
    $region47: #{tpu_custom_call.1} parent=1 // pred_check_branch
      %206 = sbr.rel (0) target = $region49
    $region48: #{tpu_custom_call.1} parent=1 // pred_region
      %207 = dma.done [#allocation9], 16
    $region49: #{tpu_custom_call.1} parent=1 // pred_fallthru
      _
    %208 = vsyncpa [#allocation3], 1
    %209 = vsyncpa [#allocation6], 1
    %210 = vsyncpa [#allocation4], 1
    %211 = vsyncpa [#allocation9], 1

</llo_original>
